<compile_context>
chip_gen: v6e
topology: v6e:2x2x1
jax: 0.10.0
libtpu: 0.0.40
codegen_flags: <defaults>
</compile_context>

<pallas_src>
import jax
import jax.numpy as jnp
from jax.experimental import pallas as pl
from jax.experimental.pallas import tpu as pltpu


_LANE = 128
_SUBLANE = 8


def _round_up(x, m):
    return -(-x // m) * m


def _round_down(x, m):
    return max(m, (x // m) * m)


def _vmem_info():
    """Per-generation (tile budget, scoped compiler limit) in bytes."""
    try:
        info = pltpu.get_tpu_info()
        cap = int(getattr(info, "vmem_capacity_bytes", 0)) or 64 * 1024 * 1024
    except Exception:
        cap = 64 * 1024 * 1024          # v7x-safe fallback (64 MiB / TC)
    budget = int(cap * 0.45)            # what the tile math may consume
    limit = int(cap * 0.60)             # scoped limit handed to Mosaic
    return budget, limit


# --------------------------------------------------------------------------
# Kernels
# --------------------------------------------------------------------------
def _resident_kernel(x_ref, w_ref, b_ref, o_ref):
    # x_ref: (TM, d_in)        batch tile
    # w_ref: (d_in, d_out_p)   resident, K-major, single-buffered
    # b_ref: (1, d_out_p)      resident f32 bias
    # o_ref: (TM, d_out_p)     lane-dense output tile
    acc = jnp.dot(x_ref[...], w_ref[...], preferred_element_type=jnp.float32)
    o_ref[...] = (acc + b_ref[...]).astype(o_ref.dtype)


def _ktiled_kernel(x_ref, w_ref, b_ref, o_ref, acc_ref):
    # Reduction over d_in on the trailing ("arbitrary") grid axis.
    k = pl.program_id(1)

    @pl.when(k == 0)
    def _():
        acc_ref[...] = jnp.zeros_like(acc_ref)

    acc_ref[...] += jnp.dot(x_ref[...], w_ref[...],
                            preferred_element_type=jnp.float32)

    @pl.when(k == pl.num_programs(1) - 1)
    def _():
        o_ref[...] = (acc_ref[...] + b_ref[...]).astype(o_ref.dtype)


# --------------------------------------------------------------------------
# Parameter preparation (call once at init, reuse across forward calls)
# --------------------------------------------------------------------------
def prepare_lin_dim_red_params(weight, bias, *, compute_dtype=None,
                               vmem_budget=None):
    """weight: (d_out, d_in) PyTorch layout, bias: (d_out,).

    Returns a dict with a pre-transposed, lane-padded, (optionally) pre-cast
    weight, an f32 padded bias, and the tiling metadata.
    """
    d_out, d_in = weight.shape
    auto_budget, vmem_limit = _vmem_info()
    budget = int(vmem_budget) if vmem_budget is not None else auto_budget

    w = weight.T                                   # (d_in, d_out), K-major
    if compute_dtype is not None:
        w = w.astype(compute_dtype)
    w_item = jnp.dtype(w.dtype).itemsize

    # Lane-dense output: pad d_out up to a multiple of 128 (unmasked vst).
    d_out_p = _round_up(d_out, _LANE)
    if d_out_p != d_out:
        w = jnp.pad(w, ((0, 0), (0, d_out_p - d_out)))
        bias = jnp.pad(bias, (0, d_out_p - d_out))
    b2 = bias.astype(jnp.float32).reshape(1, d_out_p)

    # Resident path only if the single-buffered W + bias leave at least half
    # the budget for the double-buffered x / out batch tiles.
    w_bytes = d_in * d_out_p * w_item + d_out_p * 4
    k_tiled = w_bytes > budget // 2

    tk = d_in
    if k_tiled:
        d_in_p = _round_up(d_in, _LANE)
        m = d_in_p // _LANE
        # Largest K tile (multiple of 128, dividing padded d_in) whose
        # double-buffered weight slab takes <= ~1/3 of the budget.
        cap_blocks = max(1, (budget // 3) // max(1, 2 * _LANE * d_out_p * w_item))
        blocks = 1
        for d in range(1, m + 1):
            if m % d == 0 and d <= cap_blocks:
                blocks = d
        tk = blocks * _LANE
        if d_in_p != d_in:
            w = jnp.pad(w, ((0, d_in_p - d_in), (0, 0)))   # zero K-pad: exact

    return dict(
        w=w, b=b2,
        d_in=d_in, d_out=d_out, d_out_p=d_out_p, d_in_pad=w.shape[0],
        k_tiled=k_tiled, tk=tk,
        budget=budget, vmem_limit=vmem_limit,
        compute_dtype=compute_dtype,
    )


# --------------------------------------------------------------------------
# Forward
# --------------------------------------------------------------------------
def lin_dim_red_apply(x, params, *, tm=2048, keep_padded=False):
    d_in = params["d_in"]
    d_out = params["d_out"]
    d_out_p = params["d_out_p"]
    d_in_pad = params["d_in_pad"]
    k_tiled = params["k_tiled"]
    tk = params["tk"]
    budget = params["budget"]
    vmem_limit = params["vmem_limit"]
    cdt = params["compute_dtype"]
    w, b2 = params["w"], params["b"]

    orig_shape = x.shape
    assert orig_shape[-1] == d_in, "last dim of x must equal d_in"
    out_dtype = x.dtype
    x2 = x.reshape(-1, d_in)
    B = x2.shape[0]
    if cdt is not None:
        x2 = x2.astype(cdt)

    x_item = jnp.dtype(x2.dtype).itemsize
    w_item = jnp.dtype(w.dtype).itemsize
    out_item = jnp.dtype(out_dtype).itemsize

    cost = pl.CostEstimate(
        flops=2 * B * d_in * d_out_p,
        transcendentals=0,
        bytes_accessed=(B * d_in * x_item + d_in_pad * d_out_p * w_item
                        + d_out_p * 4 + B * d_out_p * out_item),
    )

    def _cparams(dims):
        return pltpu.CompilerParams(dimension_semantics=dims,
                                    vmem_limit_bytes=vmem_limit)

    def _pick_tm(tm_vmem):
        TM = min(tm, tm_vmem, _round_up(B, _SUBLANE))
        if B >= 2 * _LANE:
            # Keep >= 2 batch tiles so both v7x TensorCores get work
            # (neutral on single-TC v5e/v6e).
            TM = min(TM, _round_down((B + 1) // 2, _LANE))
        return _round_down(TM, _LANE) if TM >= _LANE else _round_down(TM, _SUBLANE)

    if not k_tiled:
        # Single-buffered resident W + bias, double-buffered x / out tiles.
        w_bytes = d_in_pad * d_out_p * w_item + d_out_p * 4
        row_bytes = 2 * (d_in_pad * x_item + d_out_p * out_item)
        TM = _pick_tm(max(_SUBLANE, (budget - w_bytes) // row_bytes))
        grid_m = pl.cdiv(B, TM)

        def run(single_buffer):
            kw = {"pipeline_mode": pl.Buffered(1)} if single_buffer else {}
            return pl.pallas_call(
                _resident_kernel,
                out_shape=jax.ShapeDtypeStruct((B, d_out_p), out_dtype),
                grid_spec=pltpu.PrefetchScalarGridSpec(
                    num_scalar_prefetch=0,
                    grid=(grid_m,),
                    in_specs=[
                        pl.BlockSpec((TM, d_in_pad), lambda i: (i, 0)),
                        pl.BlockSpec((d_in_pad, d_out_p), lambda i: (0, 0), **kw),
                        pl.BlockSpec((1, d_out_p), lambda i: (0, 0), **kw),
                    ],
                    out_specs=pl.BlockSpec((TM, d_out_p), lambda i: (i, 0)),
                ),
                compiler_params=_cparams(("parallel",)),
                cost_estimate=cost,
            )(x2, w, b2)
    else:
        # K-reduction path: weight too large to keep fully resident.
        if d_in_pad != d_in:
            # TODO(synk): the per-call zero K-pad of x could be avoided by
            # accepting pre-padded activations from the caller.
            x2 = jnp.pad(x2, ((0, 0), (0, d_in_pad - d_in)))
        grid_k = d_in_pad // tk
        remaining = budget - 2 * tk * d_out_p * w_item - d_out_p * 4
        row_bytes = 2 * (tk * x_item + d_out_p * out_item) + d_out_p * 4  # +acc
        TM = _pick_tm(max(_SUBLANE, remaining // row_bytes))
        grid_m = pl.cdiv(B, TM)

        def run(single_buffer):
            kw = {"pipeline_mode": pl.Buffered(1)} if single_buffer else {}
            return pl.pallas_call(
                _ktiled_kernel,
                out_shape=jax.ShapeDtypeStruct((B, d_out_p), out_dtype),
                grid_spec=pltpu.PrefetchScalarGridSpec(
                    num_scalar_prefetch=0,
                    grid=(grid_m, grid_k),
                    in_specs=[
                        pl.BlockSpec((TM, tk), lambda i, k: (i, k)),
                        pl.BlockSpec((tk, d_out_p), lambda i, k: (k, 0)),
                        pl.BlockSpec((1, d_out_p), lambda i, k: (0, 0), **kw),
                    ],
                    out_specs=pl.BlockSpec((TM, d_out_p), lambda i, k: (i, 0)),
                    scratch_shapes=[pltpu.VMEM((TM, d_out_p), jnp.float32)],
                ),
                compiler_params=_cparams(("parallel", "arbitrary")),
                cost_estimate=cost,
            )(x2, w, b2)

    try:
        out = run(True)
    except Exception:
        out = run(False)   # fallback if Buffered(1) is unsupported

    if keep_padded or d_out_p == d_out:
        return out.reshape(orig_shape[:-1] + (out.shape[-1],))
    # NOTE: if this slice does not fuse into the consumer it costs a B*d_out
    # copy; pass keep_padded=True to hand the lane-padded slab downstream.
    return out[:, :d_out].reshape(orig_shape[:-1] + (d_out,))


def lin_dim_red(x, weight, bias, *, compute_dtype=None, tm=2048,
                vmem_budget=None, keep_padded=False):
    """Convenience one-shot wrapper (in real use, cache prepared params)."""
    params = prepare_lin_dim_red_params(weight, bias,
                                        compute_dtype=compute_dtype,
                                        vmem_budget=vmem_budget)
    return lin_dim_red_apply(x, params, tm=tm, keep_padded=keep_padded)


# --------------------------------------------------------------------------
if __name__ == "__main__":
    key = jax.random.PRNGKey(0)

    def make(k, B, d_in, d_out):
        kx, kw, kb = jax.random.split(k, 3)
        bound = 1.0 / (d_in ** 0.5)
        x = jax.random.normal(kx, (B, d_in), dtype=jnp.float32)
        w = jax.random.uniform(kw, (d_out, d_in), jnp.float32, -bound, bound)
        b = jax.random.uniform(kb, (d_out,), jnp.float32, -bound, bound)
        return x, w, b

    k1, k2, k3, k4 = jax.random.split(key, 4)

    # 1) Small shapes consistent with the module: batch=8, d_in=32, d_out=16.
    x, w, b = make(k1, 8, 32, 16)
    out = lin_dim_red(x, w, b)
    jax.block_until_ready(out)
    assert out.shape == (8, 16)
    assert jnp.allclose(out, x @ w.T + b, atol=1e-5, rtol=1e-5)

    # 2) Multi-tile batch (grid_m >= 2) + partial last tile + lane padding.
    x, w, b = make(k2, 520, 64, 48)
    out = lin_dim_red(x, w, b)
    jax.block_until_ready(out)
    assert out.shape == (520, 48)
    assert jnp.allclose(out, x @ w.T + b, atol=1e-4, rtol=1e-4)

    # 3) Force the K-reduction path with a tiny artificial VMEM budget
    #    (also exercises K zero-padding 200 -> 256 and the f32 accumulator).
    x, w, b = make(k3, 64, 200, 48)
    out = lin_dim_red(x, w, b, vmem_budget=128 * 1024)
    jax.block_until_ready(out)
    assert out.shape == (64, 48)
    assert jnp.allclose(out, x @ w.T + b, atol=1e-4, rtol=1e-4)

    # 4) bf16 compute path (bandwidth lever), f32 accumulation + f32 bias.
    x, w, b = make(k4, 256, 128, 32)
    out = lin_dim_red(x, w, b, compute_dtype=jnp.bfloat16)
    jax.block_until_ready(out)
    assert out.shape == (256, 32)
    assert jnp.allclose(out, x @ w.T + b, atol=3e-2, rtol=3e-2)

    print("KERNEL_OK")
</pallas_src>

<mosaic_0001>
module attributes {stable_mosaic.version = 11 : i64} {
  func.func @_resident_kernel(%arg0: i32, %arg1: memref<8x32xf32, #tpu.memory_space<vmem>>, %arg2: memref<32x128xf32, #tpu.memory_space<vmem>>, %arg3: memref<1x128xf32, #tpu.memory_space<vmem>>, %arg4: memref<8x128xf32, #tpu.memory_space<vmem>>) attributes {dimension_semantics = [#tpu.dimension_semantics<parallel>], iteration_bounds = array<i64: 1>, scalar_prefetch = 0 : i64, scratch_operands = 0 : i64, tpu.core_type = #tpu.core_type<tc>, window_params = [{transform_indices = @transform_0, window_bounds = array<i64: 8, 32>}, {pipeline_mode = #tpu.pipeline_mode<synchronous>, transform_indices = @transform_1, window_bounds = array<i64: 32, 128>}, {pipeline_mode = #tpu.pipeline_mode<synchronous>, transform_indices = @transform_2, window_bounds = array<i64: 1, 128>}, {transform_indices = @transform_3, window_bounds = array<i64: 8, 128>}]} {
    %c0 = arith.constant 0 : index
    %c0_0 = arith.constant 0 : index
    %0 = vector.load %arg1[%c0, %c0_0] : memref<8x32xf32, #tpu.memory_space<vmem>>, vector<8x32xf32>
    %c0_1 = arith.constant 0 : index
    %c0_2 = arith.constant 0 : index
    %1 = vector.load %arg2[%c0_1, %c0_2] : memref<32x128xf32, #tpu.memory_space<vmem>>, vector<32x128xf32>
    %cst = arith.constant dense<0.000000e+00> : vector<8x128xf32>
    %2 = tpu.matmul %0, %1, %cst {dimension_numbers = #tpu.dot_dimension_numbers<[1], [0], [0], [1], [0, 0, 1, 1], [], []>} : vector<8x32xf32>, vector<32x128xf32>, vector<8x128xf32> -> vector<8x128xf32>
    %c0_3 = arith.constant 0 : index
    %c0_4 = arith.constant 0 : index
    %3 = vector.load %arg3[%c0_3, %c0_4] : memref<1x128xf32, #tpu.memory_space<vmem>>, vector<1x128xf32>
    %4 = vector.broadcast %3 : vector<1x128xf32> to vector<8x128xf32>
    %5 = arith.addf %2, %4 : vector<8x128xf32>
    %c0_5 = arith.constant 0 : index
    %c0_6 = arith.constant 0 : index
    %6 = vector.load %arg4[%c0_5, %c0_6] : memref<8x128xf32, #tpu.memory_space<vmem>>, vector<8x128xf32>
    tpu.vector_store %arg4[%c0_5, %c0_6], %5 {strides = array<i32>} : memref<8x128xf32, #tpu.memory_space<vmem>>, vector<8x128xf32>,
    return
  }
  func.func @transform_0(%arg0: i32) -> (i32, i32) {
    %c0_i32 = arith.constant 0 : i32
    %c0_i32_0 = arith.constant 0 : i32
    return %arg0, %c0_i32 : i32, i32
  }
  func.func @transform_1(%arg0: i32) -> (i32, i32) {
    %c0_i32 = arith.constant 0 : i32
    %c0_i32_0 = arith.constant 0 : i32
    %c0_i32_1 = arith.constant 0 : i32
    return %c0_i32, %c0_i32_0 : i32, i32
  }
  func.func @transform_2(%arg0: i32) -> (i32, i32) {
    %c0_i32 = arith.constant 0 : i32
    %c0_i32_0 = arith.constant 0 : i32
    %c0_i32_1 = arith.constant 0 : i32
    return %c0_i32, %c0_i32_0 : i32, i32
  }
  func.func @transform_3(%arg0: i32) -> (i32, i32) {
    %c0_i32 = arith.constant 0 : i32
    %c0_i32_0 = arith.constant 0 : i32
    return %arg0, %c0_i32 : i32, i32
  }
}

module attributes {stable_mosaic.version = 11 : i64} {
  func.func @_resident_kernel(%arg0: i32, %arg1: memref<8x32xf32, #tpu.memory_space<vmem>>, %arg2: memref<32x128xf32, #tpu.memory_space<vmem>>, %arg3: memref<1x128xf32, #tpu.memory_space<vmem>>, %arg4: memref<8x128xf32, #tpu.memory_space<vmem>>) attributes {dimension_semantics = [#tpu.dimension_semantics<parallel>], iteration_bounds = array<i64: 1>, scalar_prefetch = 0 : i64, scratch_operands = 0 : i64, tpu.core_type = #tpu.core_type<tc>, window_params = [{transform_indices = @transform_0, window_bounds = array<i64: 8, 32>}, {pipeline_mode = #tpu.pipeline_mode<synchronous>, transform_indices = @transform_1, window_bounds = array<i64: 32, 128>}, {pipeline_mode = #tpu.pipeline_mode<synchronous>, transform_indices = @transform_2, window_bounds = array<i64: 1, 128>}, {transform_indices = @transform_3, window_bounds = array<i64: 8, 128>}]} {
    %c0 = arith.constant 0 : index
    %c0_0 = arith.constant 0 : index
    %0 = vector.load %arg1[%c0, %c0_0] : memref<8x32xf32, #tpu.memory_space<vmem>>, vector<8x32xf32>
    %c0_1 = arith.constant 0 : index
    %c0_2 = arith.constant 0 : index
    %1 = vector.load %arg2[%c0_1, %c0_2] : memref<32x128xf32, #tpu.memory_space<vmem>>, vector<32x128xf32>
    %cst = arith.constant dense<0.000000e+00> : vector<8x128xf32>
    %2 = tpu.matmul %0, %1, %cst {dimension_numbers = #tpu.dot_dimension_numbers<[1], [0], [0], [1], [0, 0, 1, 1], [], []>} : vector<8x32xf32>, vector<32x128xf32>, vector<8x128xf32> -> vector<8x128xf32>
    %c0_3 = arith.constant 0 : index
    %c0_4 = arith.constant 0 : index
    %3 = vector.load %arg3[%c0_3, %c0_4] : memref<1x128xf32, #tpu.memory_space<vmem>>, vector<1x128xf32>
    %4 = vector.broadcast %3 : vector<1x128xf32> to vector<8x128xf32>
    %5 = arith.addf %2, %4 : vector<8x128xf32>
    %c0_5 = arith.constant 0 : index
    %c0_6 = arith.constant 0 : index
    %6 = vector.load %arg4[%c0_5, %c0_6] : memref<8x128xf32, #tpu.memory_space<vmem>>, vector<8x128xf32>
    tpu.vector_store %arg4[%c0_5, %c0_6], %5 {strides = array<i32>} : memref<8x128xf32, #tpu.memory_space<vmem>>, vector<8x128xf32>,
    return
  }
  func.func @transform_0(%arg0: i32) -> (i32, i32) {
    %c0_i32 = arith.constant 0 : i32
    %c0_i32_0 = arith.constant 0 : i32
    return %arg0, %c0_i32 : i32, i32
  }
  func.func @transform_1(%arg0: i32) -> (i32, i32) {
    %c0_i32 = arith.constant 0 : i32
    %c0_i32_0 = arith.constant 0 : i32
    %c0_i32_1 = arith.constant 0 : i32
    return %c0_i32, %c0_i32_0 : i32, i32
  }
  func.func @transform_2(%arg0: i32) -> (i32, i32) {
    %c0_i32 = arith.constant 0 : i32
    %c0_i32_0 = arith.constant 0 : i32
    %c0_i32_1 = arith.constant 0 : i32
    return %c0_i32, %c0_i32_0 : i32, i32
  }
  func.func @transform_3(%arg0: i32) -> (i32, i32) {
    %c0_i32 = arith.constant 0 : i32
    %c0_i32_0 = arith.constant 0 : i32
    return %arg0, %c0_i32 : i32, i32
  }
}

</mosaic_0001>

<llo_original>
// kernel: tpu_custom_call.1
$region0: #{tpu_custom_call.1}
  #allocation0 [shape = 'u32[]', space=smem, size = 0x4, offset = 0x4, fixed_abs, tag = 'smem constant byte address 0x4 - core index']
  #allocation1 [shape = 'u32[144,128]{1,0:T(1,128)}', space=vmem, size = 0x12000, scoped, tag = 'internal scratch']
  %s0 = inlined_call_operand.hbm [shape: f32[8,32], index: 0, kind: input, shape index: {}]
  %s1 = inlined_call_operand.hbm [shape: f32[32,128], index: 1, kind: input, shape index: {}]
  %s2 = inlined_call_operand.vmem [shape: f32[1,128], index: 2, kind: input, shape index: {}]
  %s3 = inlined_call_operand.hbm [shape: f32[8,128], index: 3, kind: output, shape index: {}]
  %s4 = sld [smem:[#allocation0]]
  $region30: #{tpu_custom_call.1} parent=0
    _
  %s6 = ssub.s32 1, %s4
  %s7 = scalar_select 0, %s6, %s4
  $region1: #{tpu_custom_call.1} parent=0
    #allocation2 [shape = 'u8[4096]{0}', space=vmem, size = 0x1000, scoped, tag = 'input window, operand 0, single buffered']
    #allocation3 [shape = 's32[1]{0}', space=sflag, size = 0x4, scoped, tag = 'scoped memory for tpu_custom_call.1']
    #allocation4 [shape = 's32[1]{0}', space=sflag, size = 0x4, scoped, tag = 'scoped memory for tpu_custom_call.1']
    #allocation5 [shape = 'u8[16384]{0}', space=vmem, size = 0x4000, scoped, tag = 'input window, operand 1, single buffered']
    #allocation6 [shape = 's32[1]{0}', space=sflag, size = 0x4, scoped, tag = 'scoped memory for tpu_custom_call.1']
    #allocation7 [shape = 'u8[4096]{0}', space=vmem, size = 0x1000, scoped, tag = 'output window, operand 0, single buffered']
    %8 = vsyncpa [#allocation3], 0
    %9 = vsyncpa [#allocation6], 0
    %10 = vsyncpa [#allocation4], 0
    // Predicated region
    $region2: #{tpu_custom_call.1} parent=1 // pred_check
      _
    $region3: #{tpu_custom_call.1} parent=1 // pred_check_branch
      %12 = sbr.rel (0) target = $region5
    $region4: #{tpu_custom_call.1} parent=1 // pred_region
      %s14 = ssub.s32 128, 128
      %15 = vsyncadd [#allocation3], %s14
      %s17 = sshll.u32 [#allocation2], 4
      %s18 = int_to_ptr.vmem [resolvable:$true] %s17
      %20 = dma.hbm_to_vmem [thread:$0]  %s0, 128, %s18, [#allocation3]
    $region5: #{tpu_custom_call.1} parent=1 // pred_fallthru
      _
    // Predicated region
    $region6: #{tpu_custom_call.1} parent=1 // pred_check
      _
    $region7: #{tpu_custom_call.1} parent=1 // pred_check_branch
      %22 = sbr.rel (0) target = $region9
    $region8: #{tpu_custom_call.1} parent=1 // pred_region
      %s24 = ssub.s32 512, 512
      %25 = vsyncadd [#allocation6], %s24
      %s26 = sshll.u32 [#allocation5], 4
      %s27 = int_to_ptr.vmem [resolvable:$true] %s26
      %32 = dma.hbm_to_vmem [thread:$0]  %s1, 512, %s27, [#allocation6], 128, 128, 8
    $region9: #{tpu_custom_call.1} parent=1 // pred_fallthru
      _
    // Predicated region
    $region10: #{tpu_custom_call.1} parent=1 // pred_check
      _
    $region11: #{tpu_custom_call.1} parent=1 // pred_check_branch
      %34 = sbr.rel (0) target = $region13
    $region12: #{tpu_custom_call.1} parent=1 // pred_region
      _
    $region13: #{tpu_custom_call.1} parent=1 // pred_fallthru
      _
    // Predicated region
    $region14: #{tpu_custom_call.1} parent=1 // pred_check
      _
    $region15: #{tpu_custom_call.1} parent=1 // pred_check_branch
      %36 = sbr.rel (0) target = $region17
    $region16: #{tpu_custom_call.1} parent=1 // pred_region
      %37 = dma.done [#allocation3], 128
    $region17: #{tpu_custom_call.1} parent=1 // pred_fallthru
      _
    // Predicated region
    $region18: #{tpu_custom_call.1} parent=1 // pred_check
      _
    $region19: #{tpu_custom_call.1} parent=1 // pred_check_branch
      %39 = sbr.rel (0) target = $region21
    $region20: #{tpu_custom_call.1} parent=1 // pred_region
      %40 = dma.done [#allocation6], 512
    $region21: #{tpu_custom_call.1} parent=1 // pred_fallthru
      _
    %v41 = vld [vmem:[#allocation2] sm:$0xff]
    %v42 = vld [vmem:[#allocation5] sm:$0xff]
    %v43 = vld [vmem:[#allocation5 + $0x8] sm:$0xff]
    %v44 = vld [vmem:[#allocation5 + $0x10] sm:$0xff]
    %v45 = vld [vmem:[#allocation5 + $0x18] sm:$0xff]
    %v46 = vld [vmem:[%s2] sm:$0x1]
    %v48 = vlaneseq
    %v49 = vshrl.u32 %v48, 7
    %v50 = vsub.s32 0, %v49
    %v51 = vrot.slane %v46, %v50
    %vm53 = vcmask 261120
    %v55 = vsel %vm53, %v41, 0
    %57 = vmatprep.subr.mxu0 0.0
    %58 = vmatpush1.msra.mxu0 0.0
    %59 = vmatprep.subr.mxu0 0.0
    %60 = vmatpush1.msra.mxu0 0.0
    %61 = vmatprep.subr.mxu0 0.0
    %62 = vmatpush1.msra.mxu0 0.0
    %63 = vmatprep.subr.mxu0 0.0
    %64 = vmatpush1.msra.mxu0 0.0
    %65 = vmatprep.subr.mxu0 0.0
    %66 = vmatpush1.msra.mxu0 0.0
    %67 = vmatprep.subr.mxu0 0.0
    %68 = vmatpush1.msra.mxu0 0.0
    %69 = vmatprep.subr.mxu0 0.0
    %70 = vmatpush1.msra.mxu0 0.0
    %71 = vmatprep.subr.mxu0 0.0
    %72 = vmatpush1.msra.mxu0 0.0
    %73 = vmatprep.subr.mxu0 0.0
    %74 = vmatpush1.msra.mxu0 0.0
    %75 = vmatprep.subr.mxu0 0.0
    %76 = vmatpush1.msra.mxu0 0.0
    %77 = vmatprep.subr.mxu0 0.0
    %78 = vmatpush1.msra.mxu0 0.0
    %79 = vmatprep.subr.mxu0 0.0
    %80 = vmatpush1.msra.mxu0 0.0
    %81 = vmatprep.subr.mxu0 0.0
    %82 = vmatpush1.msra.mxu0 %v45
    %83 = vmatprep.subr.mxu0 0.0
    %84 = vmatpush1.msra.mxu0 %v44
    %85 = vmatprep.subr.mxu0 0.0
    %86 = vmatpush1.msra.mxu0 %v43
    %87 = vmatprep.subr.mxu0 0.0
    %88 = vmatpush1.msra.mxu0 %v42
    %89 = vmatprep.subr.mxu0 0.0
    %90 = vmatpush2.msra.mxu0 0.0
    %91 = vmatprep.subr.mxu0 0.0
    %92 = vmatpush2.msra.mxu0 0.0
    %93 = vmatprep.subr.mxu0 0.0
    %94 = vmatpush2.msra.mxu0 0.0
    %95 = vmatprep.subr.mxu0 0.0
    %96 = vmatpush2.msra.mxu0 0.0
    %97 = vmatprep.subr.mxu0 0.0
    %98 = vmatpush2.msra.mxu0 0.0
    %99 = vmatprep.subr.mxu0 0.0
    %100 = vmatpush2.msra.mxu0 0.0
    %101 = vmatprep.subr.mxu0 0.0
    %102 = vmatpush2.msra.mxu0 0.0
    %103 = vmatprep.subr.mxu0 0.0
    %104 = vmatpush2.msra.mxu0 0.0
    %105 = vmatprep.subr.mxu0 0.0
    %106 = vmatpush2.msra.mxu0 0.0
    %107 = vmatprep.subr.mxu0 0.0
    %108 = vmatpush2.msra.mxu0 0.0
    %109 = vmatprep.subr.mxu0 0.0
    %110 = vmatpush2.msra.mxu0 0.0
    %111 = vmatprep.subr.mxu0 0.0
    %112 = vmatpush2.msra.mxu0 0.0
    %113 = vmatprep.subr.mxu0 0.0
    %114 = vmatpush2.msra.mxu0 0.0
    %115 = vmatprep.subr.mxu0 0.0
    %116 = vmatpush2.msra.mxu0 0.0
    %117 = vmatprep.subr.mxu0 0.0
    %118 = vmatpush2.msra.mxu0 0.0
    %119 = vmatprep.subr.mxu0 0.0
    %120 = vmatpush2.msra.mxu0 0.0
    %121 = vmatprep.mubr.f32.mxu0 0.0
    %122 = vmatmul.mubr.f32.gmra.mxu0 %v55
    %v123 = vpop.f32.mrf.mxu0
    %v124 = vadd.f32 %v51, %v123
    %v125 = vpop.f32.mrf.mxu0
    %126 = vdwg.mxu0
    %127 = vst [vmem:[#allocation7] sm:$0xff] %v124
    // Predicated region
    $region22: #{tpu_custom_call.1} parent=1 // pred_check
      _
    $region23: #{tpu_custom_call.1} parent=1 // pred_check_branch
      %129 = sbr.rel (0) target = $region25
    $region24: #{tpu_custom_call.1} parent=1 // pred_region
      %s131 = ssub.s32 128, 128
      %132 = vsyncadd [#allocation4], %s131
      %s134 = sshll.u32 [#allocation7], 4
      %s135 = int_to_ptr.vmem [resolvable:$true] %s134
      %137 = dma.vmem_to_hbm [thread:$0]  %s135, 128, %s3, [#allocation4]
    $region25: #{tpu_custom_call.1} parent=1 // pred_fallthru
      _
    // Predicated region
    $region26: #{tpu_custom_call.1} parent=1 // pred_check
      _
    $region27: #{tpu_custom_call.1} parent=1 // pred_check_branch
      %139 = sbr.rel (0) target = $region29
    $region28: #{tpu_custom_call.1} parent=1 // pred_region
      %140 = dma.done [#allocation4], 128
    $region29: #{tpu_custom_call.1} parent=1 // pred_fallthru
      _
    %141 = vsyncpa [#allocation3], 1
    %142 = vsyncpa [#allocation6], 1
    %143 = vsyncpa [#allocation4], 1

// kernel: tpu_custom_call.1
$region0: #{tpu_custom_call.1}
  #allocation0 [shape = 'u32[]', space=smem, size = 0x4, offset = 0x4, fixed_abs, tag = 'smem constant byte address 0x4 - core index']
  #allocation1 [shape = 'u32[144,128]{1,0:T(1,128)}', space=vmem, size = 0x12000, scoped, tag = 'internal scratch']
  %s0 = inlined_call_operand.hbm [shape: f32[8,32], index: 0, kind: input, shape index: {}]
  %s1 = inlined_call_operand.hbm [shape: f32[32,128], index: 1, kind: input, shape index: {}]
  %s2 = inlined_call_operand.vmem [shape: f32[1,128], index: 2, kind: input, shape index: {}]
  %s3 = inlined_call_operand.hbm [shape: f32[8,128], index: 3, kind: output, shape index: {}]
  %s4 = sld [smem:[#allocation0]]
  $region30: #{tpu_custom_call.1} parent=0
    _
  %s6 = ssub.s32 1, %s4
  %s7 = scalar_select 0, %s6, %s4
  $region1: #{tpu_custom_call.1} parent=0
    #allocation2 [shape = 'u8[4096]{0}', space=vmem, size = 0x1000, scoped, tag = 'input window, operand 0, single buffered']
    #allocation3 [shape = 's32[1]{0}', space=sflag, size = 0x4, scoped, tag = 'scoped memory for tpu_custom_call.1']
    #allocation4 [shape = 's32[1]{0}', space=sflag, size = 0x4, scoped, tag = 'scoped memory for tpu_custom_call.1']
    #allocation5 [shape = 'u8[16384]{0}', space=vmem, size = 0x4000, scoped, tag = 'input window, operand 1, single buffered']
    #allocation6 [shape = 's32[1]{0}', space=sflag, size = 0x4, scoped, tag = 'scoped memory for tpu_custom_call.1']
    #allocation7 [shape = 'u8[4096]{0}', space=vmem, size = 0x1000, scoped, tag = 'output window, operand 0, single buffered']
    %8 = vsyncpa [#allocation3], 0
    %9 = vsyncpa [#allocation6], 0
    %10 = vsyncpa [#allocation4], 0
    // Predicated region
    $region2: #{tpu_custom_call.1} parent=1 // pred_check
      _
    $region3: #{tpu_custom_call.1} parent=1 // pred_check_branch
      %12 = sbr.rel (0) target = $region5
    $region4: #{tpu_custom_call.1} parent=1 // pred_region
      %s14 = ssub.s32 128, 128
      %15 = vsyncadd [#allocation3], %s14
      %s17 = sshll.u32 [#allocation2], 4
      %s18 = int_to_ptr.vmem [resolvable:$true] %s17
      %20 = dma.hbm_to_vmem [thread:$0]  %s0, 128, %s18, [#allocation3]
    $region5: #{tpu_custom_call.1} parent=1 // pred_fallthru
      _
    // Predicated region
    $region6: #{tpu_custom_call.1} parent=1 // pred_check
      _
    $region7: #{tpu_custom_call.1} parent=1 // pred_check_branch
      %22 = sbr.rel (0) target = $region9
    $region8: #{tpu_custom_call.1} parent=1 // pred_region
      %s24 = ssub.s32 512, 512
      %25 = vsyncadd [#allocation6], %s24
      %s26 = sshll.u32 [#allocation5], 4
      %s27 = int_to_ptr.vmem [resolvable:$true] %s26
      %32 = dma.hbm_to_vmem [thread:$0]  %s1, 512, %s27, [#allocation6], 128, 128, 8
    $region9: #{tpu_custom_call.1} parent=1 // pred_fallthru
      _
    // Predicated region
    $region10: #{tpu_custom_call.1} parent=1 // pred_check
      _
    $region11: #{tpu_custom_call.1} parent=1 // pred_check_branch
      %34 = sbr.rel (0) target = $region13
    $region12: #{tpu_custom_call.1} parent=1 // pred_region
      _
    $region13: #{tpu_custom_call.1} parent=1 // pred_fallthru
      _
    // Predicated region
    $region14: #{tpu_custom_call.1} parent=1 // pred_check
      _
    $region15: #{tpu_custom_call.1} parent=1 // pred_check_branch
      %36 = sbr.rel (0) target = $region17
    $region16: #{tpu_custom_call.1} parent=1 // pred_region
      %37 = dma.done [#allocation3], 128
    $region17: #{tpu_custom_call.1} parent=1 // pred_fallthru
      _
    // Predicated region
    $region18: #{tpu_custom_call.1} parent=1 // pred_check
      _
    $region19: #{tpu_custom_call.1} parent=1 // pred_check_branch
      %39 = sbr.rel (0) target = $region21
    $region20: #{tpu_custom_call.1} parent=1 // pred_region
      %40 = dma.done [#allocation6], 512
    $region21: #{tpu_custom_call.1} parent=1 // pred_fallthru
      _
    %v41 = vld [vmem:[#allocation2] sm:$0xff]
    %v42 = vld [vmem:[#allocation5] sm:$0xff]
    %v43 = vld [vmem:[#allocation5 + $0x8] sm:$0xff]
    %v44 = vld [vmem:[#allocation5 + $0x10] sm:$0xff]
    %v45 = vld [vmem:[#allocation5 + $0x18] sm:$0xff]
    %v46 = vld [vmem:[%s2] sm:$0x1]
    %v48 = vlaneseq
    %v49 = vshrl.u32 %v48, 7
    %v50 = vsub.s32 0, %v49
    %v51 = vrot.slane %v46, %v50
    %vm53 = vcmask 261120
    %v55 = vsel %vm53, %v41, 0
    %57 = vmatprep.subr.mxu0 0.0
    %58 = vmatpush1.msra.mxu0 0.0
    %59 = vmatprep.subr.mxu0 0.0
    %60 = vmatpush1.msra.mxu0 0.0
    %61 = vmatprep.subr.mxu0 0.0
    %62 = vmatpush1.msra.mxu0 0.0
    %63 = vmatprep.subr.mxu0 0.0
    %64 = vmatpush1.msra.mxu0 0.0
    %65 = vmatprep.subr.mxu0 0.0
    %66 = vmatpush1.msra.mxu0 0.0
    %67 = vmatprep.subr.mxu0 0.0
    %68 = vmatpush1.msra.mxu0 0.0
    %69 = vmatprep.subr.mxu0 0.0
    %70 = vmatpush1.msra.mxu0 0.0
    %71 = vmatprep.subr.mxu0 0.0
    %72 = vmatpush1.msra.mxu0 0.0
    %73 = vmatprep.subr.mxu0 0.0
    %74 = vmatpush1.msra.mxu0 0.0
    %75 = vmatprep.subr.mxu0 0.0
    %76 = vmatpush1.msra.mxu0 0.0
    %77 = vmatprep.subr.mxu0 0.0
    %78 = vmatpush1.msra.mxu0 0.0
    %79 = vmatprep.subr.mxu0 0.0
    %80 = vmatpush1.msra.mxu0 0.0
    %81 = vmatprep.subr.mxu0 0.0
    %82 = vmatpush1.msra.mxu0 %v45
    %83 = vmatprep.subr.mxu0 0.0
    %84 = vmatpush1.msra.mxu0 %v44
    %85 = vmatprep.subr.mxu0 0.0
    %86 = vmatpush1.msra.mxu0 %v43
    %87 = vmatprep.subr.mxu0 0.0
    %88 = vmatpush1.msra.mxu0 %v42
    %89 = vmatprep.subr.mxu0 0.0
    %90 = vmatpush2.msra.mxu0 0.0
    %91 = vmatprep.subr.mxu0 0.0
    %92 = vmatpush2.msra.mxu0 0.0
    %93 = vmatprep.subr.mxu0 0.0
    %94 = vmatpush2.msra.mxu0 0.0
    %95 = vmatprep.subr.mxu0 0.0
    %96 = vmatpush2.msra.mxu0 0.0
    %97 = vmatprep.subr.mxu0 0.0
    %98 = vmatpush2.msra.mxu0 0.0
    %99 = vmatprep.subr.mxu0 0.0
    %100 = vmatpush2.msra.mxu0 0.0
    %101 = vmatprep.subr.mxu0 0.0
    %102 = vmatpush2.msra.mxu0 0.0
    %103 = vmatprep.subr.mxu0 0.0
    %104 = vmatpush2.msra.mxu0 0.0
    %105 = vmatprep.subr.mxu0 0.0
    %106 = vmatpush2.msra.mxu0 0.0
    %107 = vmatprep.subr.mxu0 0.0
    %108 = vmatpush2.msra.mxu0 0.0
    %109 = vmatprep.subr.mxu0 0.0
    %110 = vmatpush2.msra.mxu0 0.0
    %111 = vmatprep.subr.mxu0 0.0
    %112 = vmatpush2.msra.mxu0 0.0
    %113 = vmatprep.subr.mxu0 0.0
    %114 = vmatpush2.msra.mxu0 0.0
    %115 = vmatprep.subr.mxu0 0.0
    %116 = vmatpush2.msra.mxu0 0.0
    %117 = vmatprep.subr.mxu0 0.0
    %118 = vmatpush2.msra.mxu0 0.0
    %119 = vmatprep.subr.mxu0 0.0
    %120 = vmatpush2.msra.mxu0 0.0
    %121 = vmatprep.mubr.f32.mxu0 0.0
    %122 = vmatmul.mubr.f32.gmra.mxu0 %v55
    %v123 = vpop.f32.mrf.mxu0
    %v124 = vadd.f32 %v51, %v123
    %v125 = vpop.f32.mrf.mxu0
    %126 = vdwg.mxu0
    %127 = vst [vmem:[#allocation7] sm:$0xff] %v124
    // Predicated region
    $region22: #{tpu_custom_call.1} parent=1 // pred_check
      _
    $region23: #{tpu_custom_call.1} parent=1 // pred_check_branch
      %129 = sbr.rel (0) target = $region25
    $region24: #{tpu_custom_call.1} parent=1 // pred_region
      %s131 = ssub.s32 128, 128
      %132 = vsyncadd [#allocation4], %s131
      %s134 = sshll.u32 [#allocation7], 4
      %s135 = int_to_ptr.vmem [resolvable:$true] %s134
      %137 = dma.vmem_to_hbm [thread:$0]  %s135, 128, %s3, [#allocation4]
    $region25: #{tpu_custom_call.1} parent=1 // pred_fallthru
      _
    // Predicated region
    $region26: #{tpu_custom_call.1} parent=1 // pred_check
      _
    $region27: #{tpu_custom_call.1} parent=1 // pred_check_branch
      %139 = sbr.rel (0) target = $region29
    $region28: #{tpu_custom_call.1} parent=1 // pred_region
      %140 = dma.done [#allocation4], 128
    $region29: #{tpu_custom_call.1} parent=1 // pred_fallthru
      _
    %141 = vsyncpa [#allocation3], 1
    %142 = vsyncpa [#allocation6], 1
    %143 = vsyncpa [#allocation4], 1

</llo_original>
